<compile_context>
chip_gen: v5e
topology: v5e:2x2
jax: 0.10.0
libtpu: 0.0.40
codegen_flags: <defaults>
</compile_context>

<pallas_src>
import jax
import jax.numpy as jnp
from jax.experimental import pallas as pl
from jax.experimental.pallas import tpu as pltpu


# ----------------------------------------------------------------------------
# Kernels
# ----------------------------------------------------------------------------
def _lrn_kernel_matmul(band_ref, x_ref, o_ref):
    # Block shape (C, THW); the leading batch dim is squeezed by the BlockSpec.
    x = x_ref[...].astype(jnp.float32)
    x_sq = x * x

    # 5-wide zero-padded channel window sum with alpha folded into the band:
    # sumsq_scaled = (1e-4 * band01) @ x_sq  -- one MXU weight tile for C<=128.
    # (Default matmul precision: band*alpha error is O(1e-3) relative on a term
    #  that is itself <= ~1e-3 of the k=2.0 constant, far below 3e-5 abs tol.)
    sumsq_scaled = jnp.dot(band_ref[...], x_sq, preferred_element_type=jnp.float32)

    base = 2.0 + sumsq_scaled
    # base ** -0.75 == r * sqrt(r) with r = rsqrt(base): 2 EUP ops + 1 VPU mul.
    r = jax.lax.rsqrt(base)
    inv = r * jnp.sqrt(r)
    o_ref[...] = (x * inv).astype(o_ref.dtype)


def _lrn_kernel_roll(x_ref, o_ref):
    # Large-C path: exact zero-padded window sum via XLU sublane rotates
    # (O(5) ops/element, independent of C).
    x = x_ref[...].astype(jnp.float32)
    C = x.shape[0]
    x_sq = x * x

    c_idx = jax.lax.broadcasted_iota(jnp.int32, x_sq.shape, 0)
    acc = x_sq
    for k in (1, 2):
        nxt = pltpu.roll(x_sq, shift=C - k, axis=0)   # nxt[c] = x_sq[c + k] (wrapped)
        acc = acc + jnp.where(c_idx < C - k, nxt, 0.0)
        prv = pltpu.roll(x_sq, shift=k, axis=0)       # prv[c] = x_sq[c - k] (wrapped)
        acc = acc + jnp.where(c_idx >= k, prv, 0.0)

    base = 2.0 + 0.0001 * acc
    r = jax.lax.rsqrt(base)
    inv = r * jnp.sqrt(r)
    o_ref[...] = (x * inv).astype(o_ref.dtype)


# ----------------------------------------------------------------------------
# Tiling
# ----------------------------------------------------------------------------
def _pick_tile_hw(N, C, HW):
    """Lane tile (multiple of 128) for the flattened H*W axis.

    Sized so one (C, tile) f32 block is ~4 MiB: double-buffered in/out blocks
    plus the in-kernel f32 temporaries stay under the 32 MiB scoped-VMEM budget
    (safe on v7x's 64 MiB VMEM; plenty of headroom on v5e/v6e) while DMAs are
    long enough to sit near the HBM roofline.  Shrinks (never below 128) only
    to keep >= ~8 total grid steps so the 'parallel' axes can shard across
    megacore / dual TensorCores.
    """
    max_lanes = max(128, ((4 << 20) // (4 * C)) // 128 * 128)
    tile = min(max_lanes, pl.cdiv(HW, 128) * 128)
    min_steps = 8
    if N * pl.cdiv(HW, tile) < min_steps:
        per_image = pl.cdiv(min_steps, N)
        tile = max(128, (HW // per_image) // 128 * 128)
    return tile


# ----------------------------------------------------------------------------
# Wrapper
# ----------------------------------------------------------------------------
def lrn(x):
    """x: (N, C, H, W) -> (N, C, H, W); same semantics as the torch LRN module."""
    N, C, H, W = x.shape
    HW = H * W
    xr = x.reshape(N, C, HW)           # channels -> sublanes, H*W -> lanes

    tile_hw = _pick_tile_hw(N, C, HW)
    grid = (N, pl.cdiv(HW, tile_hw))   # ragged last lane tile handled by Pallas
    block = (pl.Squeezed(), C, tile_hw)
    x_spec = pl.BlockSpec(block, lambda n, t: (n, 0, t))
    out_spec = pl.BlockSpec(block, lambda n, t: (n, 0, t))

    cparams = pltpu.CompilerParams(
        dimension_semantics=("parallel", "parallel"),
        vmem_limit_bytes=32 * 1024 * 1024,
    )
    out_shape = jax.ShapeDtypeStruct((N, C, HW), x.dtype)

    if C <= 128:
        # Banded 0/1 matrix with alpha folded in, built once and DMA'd once
        # (constant index_map -> fetched on the first step only).
        row = jnp.arange(C, dtype=jnp.int32)[:, None]
        col = jnp.arange(C, dtype=jnp.int32)[None, :]
        band = (jnp.abs(row - col) <= 2).astype(jnp.float32) * jnp.float32(1e-4)

        out = pl.pallas_call(
            _lrn_kernel_matmul,
            out_shape=out_shape,
            grid_spec=pltpu.PrefetchScalarGridSpec(
                num_scalar_prefetch=0,
                grid=grid,
                in_specs=[pl.BlockSpec((C, C), lambda n, t: (0, 0)), x_spec],
                out_specs=out_spec,
            ),
            compiler_params=cparams,
        )(band, xr)
    else:
        out = pl.pallas_call(
            _lrn_kernel_roll,
            out_shape=out_shape,
            grid_spec=pltpu.PrefetchScalarGridSpec(
                num_scalar_prefetch=0,
                grid=grid,
                in_specs=[x_spec],
                out_specs=out_spec,
            ),
            compiler_params=cparams,
        )(xr)

    return out.reshape(N, C, H, W)


# ----------------------------------------------------------------------------
# Pure-JAX reference mirroring the PyTorch module's forward exactly.
# ----------------------------------------------------------------------------
def _lrn_reference(x):
    N, C, H, W = x.shape
    x_sq = x.astype(jnp.float32) ** 2
    padded = jnp.pad(x_sq, ((0, 0), (2, 2), (0, 0), (0, 0)))
    sumsq = sum(padded[:, k:k + C] for k in range(5))
    return (x / (2.0 + 0.0001 * sumsq) ** 0.75).astype(x.dtype)


if __name__ == "__main__":
    key0, key1 = jax.random.split(jax.random.PRNGKey(0))

    # Spec shape (lane-aligned HW).
    x = jax.random.normal(key0, (2, 4, 16, 16), dtype=jnp.float32)
    y = jax.block_until_ready(lrn(x))
    y_ref = _lrn_reference(x)
    assert jnp.allclose(y, y_ref, atol=3e-5, rtol=1e-5), "mismatch vs reference"

    # Ragged HW (H*W % 128 != 0): exercises the no-pad masked tail-store path.
    x2 = jax.random.normal(key1, (2, 4, 12, 12), dtype=jnp.float32)
    y2 = jax.block_until_ready(lrn(x2))
    y2_ref = _lrn_reference(x2)
    assert jnp.allclose(y2, y2_ref, atol=3e-5, rtol=1e-5), "mismatch vs reference (ragged)"

    print("KERNEL_OK")
</pallas_src>

<mosaic_0001>
module attributes {stable_mosaic.version = 11 : i64} {
  func.func @_lrn_kernel_matmul(%arg0: i32, %arg1: i32, %arg2: memref<4x4xf32, #tpu.memory_space<vmem>>, %arg3: memref<1x4x128xf32, #tpu.memory_space<vmem>>, %arg4: memref<1x4x128xf32, #tpu.memory_space<vmem>>) attributes {dimension_semantics = [#tpu.dimension_semantics<parallel>, #tpu.dimension_semantics<parallel>], iteration_bounds = array<i64: 2, 2>, scalar_prefetch = 0 : i64, scratch_operands = 0 : i64, tpu.core_type = #tpu.core_type<tc>, window_params = [{pipeline_mode = #tpu.pipeline_mode<synchronous>, transform_indices = @transform_0, window_bounds = array<i64: 4, 4>}, {transform_indices = @transform_1, window_bounds = array<i64: 1, 4, 128>}, {transform_indices = @transform_2, window_bounds = array<i64: 1, 4, 128>}]} {
    %c0 = arith.constant 0 : index
    %c0_0 = arith.constant 0 : index
    %c0_1 = arith.constant 0 : index
    %0 = vector.load %arg3[%c0, %c0_0, %c0_1] : memref<1x4x128xf32, #tpu.memory_space<vmem>>, vector<1x4x128xf32>
    %1 = vector.shape_cast %0 : vector<1x4x128xf32> to vector<4x128xf32>
    %2 = arith.mulf %1, %1 : vector<4x128xf32>
    %c0_2 = arith.constant 0 : index
    %c0_3 = arith.constant 0 : index
    %3 = vector.load %arg2[%c0_2, %c0_3] : memref<4x4xf32, #tpu.memory_space<vmem>>, vector<4x4xf32>
    %cst = arith.constant dense<0.000000e+00> : vector<4x128xf32>
    %4 = tpu.matmul %3, %2, %cst {dimension_numbers = #tpu.dot_dimension_numbers<[1], [0], [0], [1], [0, 0, 1, 1], [], []>} : vector<4x4xf32>, vector<4x128xf32>, vector<4x128xf32> -> vector<4x128xf32>
    %cst_4 = arith.constant 2.000000e+00 : f32
    %5 = vector.broadcast %cst_4 : f32 to vector<4x128xf32>
    %6 = arith.addf %5, %4 : vector<4x128xf32>
    %7 = math.rsqrt %6 : vector<4x128xf32>
    %8 = math.sqrt %7 : vector<4x128xf32>
    %9 = arith.mulf %7, %8 : vector<4x128xf32>
    %10 = arith.mulf %1, %9 : vector<4x128xf32>
    %c0_5 = arith.constant 0 : index
    %c0_6 = arith.constant 0 : index
    %c0_7 = arith.constant 0 : index
    %11 = vector.load %arg4[%c0_5, %c0_6, %c0_7] : memref<1x4x128xf32, #tpu.memory_space<vmem>>, vector<1x4x128xf32>
    %12 = vector.shape_cast %11 : vector<1x4x128xf32> to vector<4x128xf32>
    %13 = vector.shape_cast %10 : vector<4x128xf32> to vector<1x4x128xf32>
    tpu.vector_store %arg4[%c0_5, %c0_6, %c0_7], %13 {strides = array<i32>} : memref<1x4x128xf32, #tpu.memory_space<vmem>>, vector<1x4x128xf32>,
    return
  }
  func.func @transform_0(%arg0: i32, %arg1: i32) -> (i32, i32) {
    %c0_i32 = arith.constant 0 : i32
    %c0_i32_0 = arith.constant 0 : i32
    %c0_i32_1 = arith.constant 0 : i32
    return %c0_i32, %c0_i32_0 : i32, i32
  }
  func.func @transform_1(%arg0: i32, %arg1: i32) -> (i32, i32, i32) {
    %c0_i32 = arith.constant 0 : i32
    %c0_i32_0 = arith.constant 0 : i32
    return %arg0, %c0_i32, %arg1 : i32, i32, i32
  }
  func.func @transform_2(%arg0: i32, %arg1: i32) -> (i32, i32, i32) {
    %c0_i32 = arith.constant 0 : i32
    %c0_i32_0 = arith.constant 0 : i32
    return %arg0, %c0_i32, %arg1 : i32, i32, i32
  }
}

</mosaic_0001>

<llo_original>
// kernel: tpu_custom_call.1
$region0: #{tpu_custom_call.1}
  #allocation0 [shape = 'u32[]', space=smem, size = 0x4, offset = 0x4, fixed_abs, tag = 'smem constant byte address 0x4 - core index']
  #allocation1 [shape = 'u32[72,128]{1,0:T(1,128)}', space=vmem, size = 0x9000, scoped, tag = 'internal scratch']
  %s0 = inlined_call_operand.hbm [shape: f32[4,4], index: 0, kind: input, shape index: {}]
  %s1 = inlined_call_operand.hbm [shape: f32[2,4,256], index: 1, kind: input, shape index: {}]
  %s2 = inlined_call_operand.hbm [shape: f32[2,4,256], index: 2, kind: output, shape index: {}]
  %s3 = sld [smem:[#allocation0]]
  $region49: #{tpu_custom_call.1} parent=0
    _
  %s5 = ssub.s32 1, %s3
  %s6 = scalar_select 0, %s5, %s3
  $region1: #{tpu_custom_call.1} parent=0
    #allocation2 [shape = 'u8[2048]{0}', space=vmem, size = 0x800, scoped, tag = 'input window, operand 0, single buffered']
    #allocation3 [shape = 's32[2]{0}', space=sflag, size = 0x8, scoped, tag = 'scoped memory for tpu_custom_call.1']
    #allocation4 [shape = 's32[2]{0}', space=sflag, size = 0x8, scoped, tag = 'scoped memory for tpu_custom_call.1']
    #allocation5 [shape = 'u8[4096]{0}', space=vmem, size = 0x1000, scoped, tag = 'input window, operand 1']
    #allocation6 [shape = 's32[2]{0}', space=sflag, size = 0x8, scoped, tag = 'scoped memory for tpu_custom_call.1']
    #allocation7 [shape = 'u8[4096]{0}', space=vmem, size = 0x1000, scoped, tag = 'output window, operand 0']
    %7 = vsyncpa [#allocation3], 0
    %8 = vsyncpa [#allocation6], 0
    %s9 = scalar_lea.sflag [#allocation6], 1
    %10 = vsyncpa %s9, 0
    %11 = vsyncpa [#allocation4], 0
    %s12 = scalar_lea.sflag [#allocation4], 1
    %13 = vsyncpa %s12, 0
    loop: start=0, step=1, limit=6
    $region2: #{tpu_custom_call.1} parent=1 // loop_pre_header
      _
    $region3: #{tpu_custom_call.1} parent=1 // loop_header
      %s15 = sphi 0, %s19
      %p16 = scmp.ge.s32.totalorder %s15, 6
      %s22 = sphi 0, %s34
      %s23 = sphi 0, %s30
      %s24 = sphi 0, %s22
      %s25 = sphi 0, %s23
      %s26 = sphi 0, %s24
      %s27 = sphi 0, %s25
      %s35 = sphi 0, %s35
      %s37 = sphi 0, %s35
      %s38 = sphi 0, %s37
      %s52 = sphi 0, %s38
      %s60 = sphi 0, %s62
      %s63 = sphi 0, %s60
      %s64 = sphi 0, %s63
      %s80 = sphi 0, %s64
      %s88 = sphi 0, %s90
      %s91 = sphi 0, %s88
      %s92 = sphi 0, %s91
      %s108 = sphi 0, %s92
    $region4: #{tpu_custom_call.1} parent=1 // loop_header_branch
      %18 = sbr.rel (%p16) target = $region8
    $region5: #{tpu_custom_call.1} parent=1 // loop_body
      %s20 = ssub.s32 %s15, 1
      %s21 = ssub.s32 %s15, 2
      %s28 = sadd.s32 1, %s23
      %p29 = scmp.ge.s32.totalorder %s28, 2
      %s30 = scalar_select %p29, 0, %s28
      %s31 = sadd.s32 1, %s22
      %s32 = scalar_select %p29, %s31, %s22
      %p33 = scmp.ge.s32.totalorder %s32, 2
      %s34 = scalar_select %p33, 0, %s32
      %s36 = sadd.s32 %s35, 1
      %p39 = scmp.eq.s32.totalorder %s15, 3
      %p40 = scmp.ne.s32.totalorder %s35, %s37
      %p41 = scmp.eq.s32.totalorder %s15, 0
      %p42 = por %p40, %p41
      %p43 = scmp.ne.s32.totalorder %s35, %s37
      %p44 = scmp.eq.s32.totalorder %s20, 3
      %p45 = por %p43, %p44
      %p46 = scmp.ne.s32.totalorder %s37, %s38
      %p47 = scmp.eq.s32.totalorder %s20, 0
      %p48 = por %p46, %p47
      %p49 = scmp.ne.s32.totalorder %s37, %s38
      %p50 = scmp.eq.s32.totalorder %s21, 3
      %p51 = por %p49, %p50
      %p53 = scmp.ne.s32.totalorder %s38, %s52
      %p54 = scmp.eq.s32.totalorder %s21, 0
      %p55 = por %p53, %p54
      %s56 = ssub.s32 %s22, %s34
      %s57 = ssub.s32 %s23, %s30
      %s58 = sor.u32 %s56, %s57
      %p59 = scmp.eq.s32.totalorder %s58, 0
      %s61 = sadd.s32 %s60, 1
      %s62 = scalar_select %p59, %s60, %s61
      %p65 = pneg %p59
      %p66 = scmp.eq.s32.totalorder %s15, 3
      %p67 = por %p65, %p66
      %p68 = scmp.ne.s32.totalorder %s60, %s63
      %p69 = scmp.eq.s32.totalorder %s15, 0
      %p70 = por %p68, %p69
      %p71 = scmp.ne.s32.totalorder %s60, %s63
      %p72 = scmp.eq.s32.totalorder %s20, 3
      %p73 = por %p71, %p72
      %p74 = scmp.ne.s32.totalorder %s63, %s64
      %p75 = scmp.eq.s32.totalorder %s20, 0
      %p76 = por %p74, %p75
      %p77 = scmp.ne.s32.totalorder %s63, %s64
      %p78 = scmp.eq.s32.totalorder %s21, 3
      %p79 = por %p77, %p78
      %p81 = scmp.ne.s32.totalorder %s64, %s80
      %p82 = scmp.eq.s32.totalorder %s21, 0
      %p83 = por %p81, %p82
      %s84 = ssub.s32 %s22, %s34
      %s85 = ssub.s32 %s23, %s30
      %s86 = sor.u32 %s84, %s85
      %p87 = scmp.eq.s32.totalorder %s86, 0
      %s89 = sadd.s32 %s88, 1
      %s90 = scalar_select %p87, %s88, %s89
      %p93 = pneg %p87
      %p94 = scmp.eq.s32.totalorder %s15, 3
      %p95 = por %p93, %p94
      %p96 = scmp.ne.s32.totalorder %s88, %s91
      %p97 = scmp.eq.s32.totalorder %s15, 0
      %p98 = por %p96, %p97
      %p99 = scmp.ne.s32.totalorder %s88, %s91
      %p100 = scmp.eq.s32.totalorder %s20, 3
      %p101 = por %p99, %p100
      %p102 = scmp.ne.s32.totalorder %s91, %s92
      %p103 = scmp.eq.s32.totalorder %s20, 0
      %p104 = por %p102, %p103
      %p105 = scmp.ne.s32.totalorder %s91, %s92
      %p106 = scmp.eq.s32.totalorder %s21, 3
      %p107 = por %p105, %p106
      %p109 = scmp.ne.s32.totalorder %s92, %s108
      %p110 = scmp.eq.s32.totalorder %s21, 0
      %p111 = por %p109, %p110
      %p112 = scmp.le.s32.totalorder 1, %s15
      %p113 = scmp.lt.s32.totalorder %s15, 5
      %p114 = pnand %p112, %p113
      %p115 = pneg %p114
      // Predicated region
      $region9: #{tpu_custom_call.1} parent=5 // pred_check
        _
      $region10: #{tpu_custom_call.1} parent=5 // pred_check_branch
        %117 = sbr.rel (%p114) target = $region12
      $region11: #{tpu_custom_call.1} parent=5 // pred_region
        %s118 = ssub.s32 %s15, 1
        // Predicated region
        $region13: #{tpu_custom_call.1} parent=11 // pred_check
          %p119 = pneg %p48
        $region14: #{tpu_custom_call.1} parent=11 // pred_check_branch
          %121 = sbr.rel (%p119) target = $region16
        $region15: #{tpu_custom_call.1} parent=11 // pred_region
          %123 = vsyncadd [#allocation3], 0
          %s125 = sshll.u32 %s0, 4
          %s126 = int_to_ptr.hbm [resolvable:$true] %s125
          %s127 = sshll.u32 [#allocation2], 4
          %s128 = int_to_ptr.vmem [resolvable:$true] %s127
          %130 = dma.hbm_to_vmem [thread:$0]  %s126, 64, %s128, [#allocation3]
        $region16: #{tpu_custom_call.1} parent=11 // pred_fallthru
          _
      $region12: #{tpu_custom_call.1} parent=5 // pred_fallthru
        _
      %p131 = scmp.lt.s32.totalorder %s15, 4
      // Predicated region
      $region17: #{tpu_custom_call.1} parent=5 // pred_check
        %p132 = pneg %p131
      $region18: #{tpu_custom_call.1} parent=5 // pred_check_branch
        %134 = sbr.rel (%p132) target = $region20
      $region19: #{tpu_custom_call.1} parent=5 // pred_region
        // Predicated region
        $region21: #{tpu_custom_call.1} parent=19 // pred_check
          %p135 = pneg %p70
        $region22: #{tpu_custom_call.1} parent=19 // pred_check_branch
          %137 = sbr.rel (%p135) target = $region24
        $region23: #{tpu_custom_call.1} parent=19 // pred_region
          %s138 = sand.u32 %s60, 1
          %s139 = scalar_lea.sflag [#allocation6], %s138
          %s140 = sand.u32 %s60, 1
          %s141 = smul.addr %s140, 4
          %s142 = scalar_lea.vmem [#allocation5], %s141
          %144 = vsyncadd %s139, 0
          %s145 = smul.addr %s22, 2
          %s146 = sadd.s32 %s23, %s145
          %s147 = smul.addr %s146, 4
          %s148 = scalar_lea.hbm %s1, %s147
          %s150 = sshll.u32 %s148, 4
          %s151 = int_to_ptr.hbm [resolvable:$true] %s150
          %s152 = sshll.u32 %s142, 4
          %s153 = int_to_ptr.vmem [resolvable:$true] %s152
          %155 = dma.hbm_to_vmem [thread:$0]  %s151, 64, %s153, %s139
        $region24: #{tpu_custom_call.1} parent=19 // pred_fallthru
          _
      $region20: #{tpu_custom_call.1} parent=5 // pred_fallthru
        _
      %p156 = scmp.le.s32.totalorder 1, %s15
      %p157 = scmp.lt.s32.totalorder %s15, 5
      %p158 = pnand %p156, %p157
      %p159 = pneg %p158
      // Predicated region
      $region25: #{tpu_custom_call.1} parent=5 // pred_check
        _
      $region26: #{tpu_custom_call.1} parent=5 // pred_check_branch
        %161 = sbr.rel (%p158) target = $region28
      $region27: #{tpu_custom_call.1} parent=5 // pred_region
        %s162 = ssub.s32 %s15, 1
        // Predicated region
        $region29: #{tpu_custom_call.1} parent=27 // pred_check
          %p163 = pneg %p48
        $region30: #{tpu_custom_call.1} parent=27 // pred_check_branch
          %165 = sbr.rel (%p163) target = $region32
        $region31: #{tpu_custom_call.1} parent=27 // pred_region
          %167 = dma.done [#allocation3], 64
        $region32: #{tpu_custom_call.1} parent=27 // pred_fallthru
          _
        %s168 = sand.u32 %s63, 1
        %s169 = scalar_lea.sflag [#allocation6], %s168
        %s170 = sand.u32 %s63, 1
        %s171 = smul.addr %s170, 4
        %s172 = scalar_lea.vmem [#allocation5], %s171
        // Predicated region
        $region33: #{tpu_custom_call.1} parent=27 // pred_check
          %p173 = pneg %p76
        $region34: #{tpu_custom_call.1} parent=27 // pred_check_branch
          %175 = sbr.rel (%p173) target = $region36
        $region35: #{tpu_custom_call.1} parent=27 // pred_region
          %177 = dma.done %s169, 64
        $region36: #{tpu_custom_call.1} parent=27 // pred_fallthru
          _
        %p178 = pneg %p48
        %p179 = pneg %p45
        %s180 = sand.u32 %s63, 1
        %s181 = scalar_lea.sflag [#allocation6], %s180
        %s182 = sand.u32 %s63, 1
        %s183 = smul.addr %s182, 4
        %s184 = scalar_lea.vmem [#allocation5], %s183
        %p185 = pneg %p76
        %p186 = pneg %p73
        %p187 = pneg %p104
        %p188 = pneg %p101
        %s189 = sand.u32 %s91, 1
        %s190 = scalar_lea.sflag [#allocation4], %s189
        %s191 = sand.u32 %s91, 1
        %s192 = smul.addr %s191, 4
        %s193 = scalar_lea.vmem [#allocation7], %s192
        %v194 = vld [vmem:[%s172] sm:$0xf]
        %v195 = vmul.f32 %v194, %v194
        %v196 = vld [vmem:[#allocation2] sm:$0xf]
        %vm197 = vcmask 31744
        %v199 = vsel %vm197, %v196, 0
        %vm201 = vcmask 1043456
        %v203 = vsel %vm201, %v195, 0
        %205 = vmatpush.msra.mxu0 0.0
        %206 = vmatpush.msra.mxu0 0.0
        %207 = vmatpush.msra.mxu0 0.0
        %208 = vmatpush.msra.mxu0 0.0
        %209 = vmatpush.msra.mxu0 0.0
        %210 = vmatpush.msra.mxu0 0.0
        %211 = vmatpush.msra.mxu0 0.0
        %212 = vmatpush.msra.mxu0 0.0
        %213 = vmatpush.msra.mxu0 0.0
        %214 = vmatpush.msra.mxu0 0.0
        %215 = vmatpush.msra.mxu0 0.0
        %216 = vmatpush.msra.mxu0 0.0
        %217 = vmatpush.msra.mxu0 0.0
        %218 = vmatpush.msra.mxu0 0.0
        %219 = vmatpush.msra.mxu0 0.0
        %220 = vmatpush.msra.mxu0 %v203
        %221 = vmatmul.f32.gmra.mxu0 %v199
        %v222 = vpop.f32.mrf.mxu0
        %v223 = vadd.f32 2.0, %v222
        %224 = vdwg.mxu0
        %v225 = vrsqrt.pop %v223
        %v226 = vmul.f32 %v225, %v223
        %v227 = vmul.f32 %v226, %v225
        %v228 = vmul.f32 0.5, %v227
        %v229 = vsub.f32 1.5, %v228
        %v230 = vmul.f32 %v225, %v229
        %vm231 = vweird.f32 %v223
        %vm232 = vweird.f32 %v225
        %vm233 = vmor %vm231, %vm232
        %v234 = vsel %vm233, %v225, %v230
        %v235 = vrsqrt.pop %v234
        %v236 = vmul.f32 %v235, %v234
        %v237 = vmul.f32 %v236, %v235
        %v238 = vmul.f32 0.5, %v237
        %v239 = vsub.f32 1.5, %v238
        %v240 = vmul.f32 %v235, %v239
        %v241 = vmul.f32 %v234, %v240
        %vm242 = vcmp.eq.f32.partialorder %v234, inf
        %v243 = vsel %vm242, %v234, %v241
        %vm244 = vcmp.eq.f32.partialorder %v234, 0.0
        %v245 = vand.u32 %v234, 2147483648
        %v246 = vsel %vm244, %v245, %v243
        %v247 = vmul.f32 %v234, %v246
        %v248 = vmul.f32 %v194, %v247
        %249 = vst [vmem:[%s193] sm:$0xf] %v248
        %s250 = sand.u32 %s91, 1
        %s251 = scalar_lea.sflag [#allocation4], %s250
        %s252 = sand.u32 %s91, 1
        %s253 = smul.addr %s252, 4
        %s254 = scalar_lea.vmem [#allocation7], %s253
        // Predicated region
        $region37: #{tpu_custom_call.1} parent=27 // pred_check
          %p255 = pneg %p101
        $region38: #{tpu_custom_call.1} parent=27 // pred_check_branch
          %257 = sbr.rel (%p255) target = $region40
        $region39: #{tpu_custom_call.1} parent=27 // pred_region
          %259 = vsyncadd %s251, 0
          %s260 = smul.addr %s24, 2
          %s261 = sadd.s32 %s25, %s260
          %s262 = smul.addr %s261, 4
          %s263 = scalar_lea.hbm %s2, %s262
          %s265 = sshll.u32 %s254, 4
          %s266 = int_to_ptr.vmem [resolvable:$true] %s265
          %s267 = sshll.u32 %s263, 4
          %s268 = int_to_ptr.hbm [resolvable:$true] %s267
          %270 = dma.vmem_to_hbm [thread:$0]  %s266, 64, %s268, %s251
        $region40: #{tpu_custom_call.1} parent=27 // pred_fallthru
          _
      $region28: #{tpu_custom_call.1} parent=5 // pred_fallthru
        _
      %p271 = scmp.le.s32.totalorder 2, %s15
      // Predicated region
      $region41: #{tpu_custom_call.1} parent=5 // pred_check
        %p272 = pneg %p271
      $region42: #{tpu_custom_call.1} parent=5 // pred_check_branch
        %274 = sbr.rel (%p272) target = $region44
      $region43: #{tpu_custom_call.1} parent=5 // pred_region
        %s275 = ssub.s32 %s15, 2
        // Predicated region
        $region45: #{tpu_custom_call.1} parent=43 // pred_check
          %p276 = pneg %p107
        $region46: #{tpu_custom_call.1} parent=43 // pred_check_branch
          %278 = sbr.rel (%p276) target = $region48
        $region47: #{tpu_custom_call.1} parent=43 // pred_region
          %s279 = sand.u32 %s92, 1
          %s280 = scalar_lea.sflag [#allocation4], %s279
          %s281 = sand.u32 %s92, 1
          %s282 = smul.addr %s281, 4
          %s283 = scalar_lea.vmem [#allocation7], %s282
          %285 = dma.done %s280, 64
        $region48: #{tpu_custom_call.1} parent=43 // pred_fallthru
          _
      $region44: #{tpu_custom_call.1} parent=5 // pred_fallthru
        _
    $region6: #{tpu_custom_call.1} parent=1 // loop_footer
      %s19 = sadd.s32 1, %s15
    $region7: #{tpu_custom_call.1} parent=1 // loop_footer_branch
      %14 = sbr.rel target = $region3
    $region8: #{tpu_custom_call.1} parent=1 // loop_exit
      _
    %286 = vsyncpa [#allocation3], 1
    %s287 = scalar_lea.sflag [#allocation3], 1
    %288 = vsyncpa %s287, 1
    %289 = vsyncpa [#allocation6], 1
    %s290 = scalar_lea.sflag [#allocation6], 1
    %291 = vsyncpa %s290, 1
    %292 = vsyncpa [#allocation4], 1
    %s293 = scalar_lea.sflag [#allocation4], 1
    %294 = vsyncpa %s293, 1

</llo_original>
